<compile_context>
chip_gen: v5e
topology: v5e:2x2
jax: 0.10.0
libtpu: 0.0.40
codegen_flags: <defaults>
</compile_context>

<pallas_src>
import math

import jax
import jax.numpy as jnp
from jax.experimental import pallas as pl
from jax.experimental.pallas import tpu as pltpu

_C = math.sqrt(2.0 / math.pi)
_C3 = _C * 0.044715


def _round_up(a: int, b: int) -> int:
    return ((a + b - 1) // b) * b


def _make_gelu_kernel(compute_dtype):
    def kernel(x_ref, o_ref):
        x = x_ref[...].astype(compute_dtype)
        # 0.5 * x * (1 + tanh(c*x + (c*0.044715)*x^3)), constants folded.
        # Python float literals are weak-typed, so bf16 stays bf16 end-to-end
        # when compute_dtype is bf16 (v6e/v7x); otherwise everything is f32.
        y = 0.5 * x * (1.0 + jnp.tanh(x * (_C + _C3 * (x * x))))
        o_ref[...] = y.astype(o_ref.dtype)

    return kernel


def _chip_profile():
    """Trace-time chip heuristics; robust to unknown / emulated backends."""
    kind = ""
    try:
        kind = jax.devices()[0].device_kind.lower()
    except Exception:
        pass
    is_v7 = "v7" in kind
    is_v6 = "v6" in kind
    num_tensorcores = 2 if is_v7 else 1      # v7x: 2 TCs/chip; v5e/v6e: 1
    bf16_native = is_v6 or is_v7             # v6e/v7x VPU+EUP are bf16-native
    # ~4 MiB/buffer on v6e/v7x (2 arrays x 2 buffers x 4 MiB = 16 MiB, inside
    # the 32 MiB default scoped-VMEM budget); ~2 MiB on v5e / unknown chips.
    tile_bytes = (4 << 20) if (is_v6 or is_v7) else (2 << 20)
    return num_tensorcores, bf16_native, tile_bytes


def _pick_cols(n: int):
    """Largest lane-dense column count that divides n (prefer rows >= 8)."""
    candidates = (2048, 1024, 512, 256, 128)
    for c in candidates:
        if n % c == 0 and n // c >= 8:
            return c
    for c in candidates:
        if n % c == 0:
            return c
    return None


def _tile_rows(rows: int, cols: int, itemsize: int, num_tc: int, tile_bytes: int) -> int:
    # Sublane packing multiple: 8 (f32), 16 (bf16), 32 (int8/fp8) -> tile
    # boundaries stay on fully packed vregs (no masked loads/stores).
    sub = max(8, 32 // itemsize)
    if rows < sub:
        return rows  # "equals full array dim" escape hatch of the (8,128) rule

    tr = max(sub, ((tile_bytes // itemsize) // cols) // sub * sub)
    tr = min(tr, _round_up(rows, sub))

    # Split only as much as the chip needs:
    #  * 1 TC (v5e/v6e): grid is a serial loop; 2 blocks suffice to pipeline.
    #  * 2 TC (v7x): ~4 blocks for load balance, tile floored at ~1 MiB/buffer.
    min_blocks = 4 if num_tc >= 2 else 2
    if num_tc >= 2:
        floor_rows = max(sub, ((1 << 20) // itemsize // cols) // sub * sub)
    else:
        floor_rows = sub
    if pl.cdiv(rows, tr) < min_blocks:
        shrunk = max(_round_up(pl.cdiv(rows, min_blocks), sub), floor_rows)
        tr = min(tr, max(sub, shrunk))
    return tr


def _gelu_2d(x2: jax.Array) -> jax.Array:
    """Run the GELU kernel on a lane-dense (rows, C) slab."""
    rows, cols = x2.shape
    dtype = x2.dtype
    itemsize = jnp.dtype(dtype).itemsize

    num_tc, bf16_native, tile_bytes = _chip_profile()
    tr = _tile_rows(rows, cols, itemsize, num_tc, tile_bytes)
    grid = (pl.cdiv(rows, tr),)
    n = rows * cols

    compute_dtype = dtype if (dtype == jnp.bfloat16 and bf16_native) else jnp.float32

    return pl.pallas_call(
        _make_gelu_kernel(compute_dtype),
        out_shape=jax.ShapeDtypeStruct((rows, cols), dtype),
        grid_spec=pltpu.PrefetchScalarGridSpec(
            num_scalar_prefetch=0,
            grid=grid,
            # Default double-buffering is sufficient for a pure streaming
            # kernel; sweep pipeline_mode=pl.Buffered(3) only if xprof shows
            # exposed DMA at block boundaries.
            in_specs=[pl.BlockSpec((tr, cols), lambda i: (i, 0))],
            out_specs=pl.BlockSpec((tr, cols), lambda i: (i, 0)),
        ),
        compiler_params=pltpu.CompilerParams(
            dimension_semantics=("parallel",),
        ),
        cost_estimate=pl.CostEstimate(
            flops=8 * n,
            transcendentals=n,
            bytes_accessed=2 * n * itemsize,
        ),
    )(x2)


def gelu_pallas(x: jax.Array) -> jax.Array:
    orig_shape = x.shape
    n = x.size
    if n == 0:
        return x

    flat = x.reshape(-1)  # contiguous reshape: free layout plumbing
    cols = _pick_cols(n)
    if cols is not None:
        # Fast path: no padding copies at all.
        out = _gelu_2d(flat.reshape(n // cols, cols))
        return out.reshape(orig_shape)

    # Rare fallback (N % 128 != 0): pad the flat tail to the next multiple of
    # 128 only (minimal extra HBM traffic), then slice it back off.
    cols = 128
    padded = _round_up(n, cols)
    flat_p = jnp.pad(flat, (0, padded - n))
    out = _gelu_2d(flat_p.reshape(padded // cols, cols))
    return out.reshape(-1)[:n].reshape(orig_shape)


def gelu_ref(x):
    # Pure-JAX reference matching the PyTorch forward exactly.
    c = jnp.sqrt(jnp.asarray(2.0 / jnp.pi, dtype=x.dtype))
    return 0.5 * x * (1.0 + jnp.tanh(c * (x + 0.044715 * jnp.power(x, 3))))


if __name__ == "__main__":
    key = jax.random.PRNGKey(0)

    # Small NCHW-like input, consistent with a generic activation module.
    x = jax.random.normal(key, (2, 4, 16, 16), dtype=jnp.float32)
    y = jax.block_until_ready(gelu_pallas(x))
    y_ref = gelu_ref(x)
    assert y.shape == x.shape and y.dtype == x.dtype
    assert jnp.allclose(y, y_ref, atol=1e-5, rtol=1e-5), "f32 mismatch vs reference"

    # Exercise the ragged-grid path (rows not a multiple of the row tile).
    x2 = jax.random.normal(jax.random.PRNGKey(1), (3, 5, 128), dtype=jnp.float32)
    y2 = jax.block_until_ready(gelu_pallas(x2))
    assert jnp.allclose(y2, gelu_ref(x2), atol=1e-5, rtol=1e-5), "ragged mismatch"

    # Exercise the bf16 path (native bf16 compute on v6e/v7x, f32 on v5e).
    xb = jax.random.normal(jax.random.PRNGKey(2), (8, 512), dtype=jnp.bfloat16)
    yb = jax.block_until_ready(gelu_pallas(xb))
    yb_ref = gelu_ref(xb.astype(jnp.float32)).astype(jnp.bfloat16)
    assert yb.dtype == jnp.bfloat16
    assert jnp.allclose(yb.astype(jnp.float32), yb_ref.astype(jnp.float32),
                        atol=3e-2, rtol=3e-2), "bf16 mismatch"

    # Exercise the minimal pad fallback (total size not a multiple of 128).
    x3 = jax.random.normal(jax.random.PRNGKey(3), (5, 7), dtype=jnp.float32)
    y3 = jax.block_until_ready(gelu_pallas(x3))
    assert jnp.allclose(y3, gelu_ref(x3), atol=1e-5, rtol=1e-5), "pad-path mismatch"

    print("KERNEL_OK")
</pallas_src>

<mosaic_0001>
module attributes {stable_mosaic.version = 11 : i64} {
  func.func @kernel(%arg0: i32, %arg1: memref<8x256xf32, #tpu.memory_space<vmem>>, %arg2: memref<8x256xf32, #tpu.memory_space<vmem>>) attributes {dimension_semantics = [#tpu.dimension_semantics<parallel>], iteration_bounds = array<i64: 1>, scalar_prefetch = 0 : i64, scratch_operands = 0 : i64, tpu.core_type = #tpu.core_type<tc>, window_params = [{transform_indices = @transform_0, window_bounds = array<i64: 8, 256>}, {transform_indices = @transform_1, window_bounds = array<i64: 8, 256>}]} {
    %c0 = arith.constant 0 : index
    %c0_0 = arith.constant 0 : index
    %0 = vector.load %arg1[%c0, %c0_0] : memref<8x256xf32, #tpu.memory_space<vmem>>, vector<8x256xf32>
    %cst = arith.constant 5.000000e-01 : f32
    %1 = vector.broadcast %cst : f32 to vector<8x256xf32>
    %2 = arith.mulf %1, %0 : vector<8x256xf32>
    %3 = arith.mulf %0, %0 : vector<8x256xf32>
    %cst_1 = arith.constant 0.0356774069 : f32
    %4 = vector.broadcast %cst_1 : f32 to vector<8x256xf32>
    %5 = arith.mulf %4, %3 : vector<8x256xf32>
    %cst_2 = arith.constant 0.797884583 : f32
    %6 = vector.broadcast %cst_2 : f32 to vector<8x256xf32>
    %7 = arith.addf %6, %5 : vector<8x256xf32>
    %8 = arith.mulf %0, %7 : vector<8x256xf32>
    %9 = math.tanh %8 : vector<8x256xf32>
    %cst_3 = arith.constant 1.000000e+00 : f32
    %10 = vector.broadcast %cst_3 : f32 to vector<8x256xf32>
    %11 = arith.addf %10, %9 : vector<8x256xf32>
    %12 = arith.mulf %2, %11 : vector<8x256xf32>
    %c0_4 = arith.constant 0 : index
    %c0_5 = arith.constant 0 : index
    %13 = vector.load %arg2[%c0_4, %c0_5] : memref<8x256xf32, #tpu.memory_space<vmem>>, vector<8x256xf32>
    tpu.vector_store %arg2[%c0_4, %c0_5], %12 {strides = array<i32>} : memref<8x256xf32, #tpu.memory_space<vmem>>, vector<8x256xf32>,
    return
  }
  func.func @transform_0(%arg0: i32) -> (i32, i32) {
    %c0_i32 = arith.constant 0 : i32
    %c0_i32_0 = arith.constant 0 : i32
    return %arg0, %c0_i32 : i32, i32
  }
  func.func @transform_1(%arg0: i32) -> (i32, i32) {
    %c0_i32 = arith.constant 0 : i32
    %c0_i32_0 = arith.constant 0 : i32
    return %arg0, %c0_i32 : i32, i32
  }
}

</mosaic_0001>

<llo_original>
// kernel: tpu_custom_call.1
$region0: #{tpu_custom_call.1}
  #allocation0 [shape = 'u32[]', space=smem, size = 0x4, offset = 0x4, fixed_abs, tag = 'smem constant byte address 0x4 - core index']
  #allocation1 [shape = 'u32[72,128]{1,0:T(1,128)}', space=vmem, size = 0x9000, scoped, tag = 'internal scratch']
  %s0 = inlined_call_operand.hbm [shape: f32[8,256], index: 0, kind: input, shape index: {}]
  %s1 = inlined_call_operand.hbm [shape: f32[8,256], index: 1, kind: output, shape index: {}]
  %s2 = sld [smem:[#allocation0]]
  $region18: #{tpu_custom_call.1} parent=0
    _
  %s4 = ssub.s32 1, %s2
  %s5 = scalar_select 0, %s4, %s2
  $region1: #{tpu_custom_call.1} parent=0
    #allocation2 [shape = 'u8[8192]{0}', space=vmem, size = 0x2000, scoped, tag = 'input window, operand 0, single buffered']
    #allocation3 [shape = 's32[1]{0}', space=sflag, size = 0x4, scoped, tag = 'scoped memory for tpu_custom_call.1']
    #allocation4 [shape = 's32[1]{0}', space=sflag, size = 0x4, scoped, tag = 'scoped memory for tpu_custom_call.1']
    #allocation5 [shape = 'u8[8192]{0}', space=vmem, size = 0x2000, scoped, tag = 'output window, operand 0, single buffered']
    %6 = vsyncpa [#allocation3], 0
    %7 = vsyncpa [#allocation4], 0
    // Predicated region
    $region2: #{tpu_custom_call.1} parent=1 // pred_check
      _
    $region3: #{tpu_custom_call.1} parent=1 // pred_check_branch
      %9 = sbr.rel (0) target = $region5
    $region4: #{tpu_custom_call.1} parent=1 // pred_region
      %11 = vsyncadd [#allocation3], 0
      %s13 = sshll.u32 %s0, 4
      %s14 = int_to_ptr.hbm [resolvable:$true] %s13
      %s15 = sshll.u32 [#allocation2], 4
      %s16 = int_to_ptr.vmem [resolvable:$true] %s15
      %18 = dma.hbm_to_vmem [thread:$0]  %s14, 256, %s16, [#allocation3]
    $region5: #{tpu_custom_call.1} parent=1 // pred_fallthru
      _
    // Predicated region
    $region6: #{tpu_custom_call.1} parent=1 // pred_check
      _
    $region7: #{tpu_custom_call.1} parent=1 // pred_check_branch
      %20 = sbr.rel (0) target = $region9
    $region8: #{tpu_custom_call.1} parent=1 // pred_region
      %22 = dma.done [#allocation3], 256
    $region9: #{tpu_custom_call.1} parent=1 // pred_fallthru
      _
    %v23 = vld [vmem:[#allocation2] sm:$0xff]
    %v24 = vld [vmem:[#allocation2 + $0x8] sm:$0xff]
    %v25 = vmul.f32 %v23, 0.5
    %v26 = vmul.f32 %v24, 0.5
    %v27 = vmul.f32 %v23, %v23
    %v28 = vmul.f32 %v24, %v24
    %v29 = vmul.f32 %v27, 0.035677407
    %v30 = vmul.f32 %v28, 0.035677407
    %v31 = vadd.f32 %v29, 0.7978846
    %v32 = vadd.f32 %v30, 0.7978846
    %v33 = vmul.f32 %v23, %v31
    %v34 = vmul.f32 %v24, %v32
    %v35 = vtanh.pop %v33
    %v36 = vtanh.pop %v34
    %v37 = vadd.f32 %v35, 1.0
    %v38 = vadd.f32 %v36, 1.0
    %v39 = vmul.f32 %v25, %v37
    %v40 = vmul.f32 %v26, %v38
    %41 = vst [vmem:[#allocation5] sm:$0xff] %v39
    %42 = vst [vmem:[#allocation5 + $0x8] sm:$0xff] %v40
    // Predicated region
    $region10: #{tpu_custom_call.1} parent=1 // pred_check
      _
    $region11: #{tpu_custom_call.1} parent=1 // pred_check_branch
      %44 = sbr.rel (0) target = $region13
    $region12: #{tpu_custom_call.1} parent=1 // pred_region
      %46 = vsyncadd [#allocation4], 0
      %s48 = sshll.u32 [#allocation5], 4
      %s49 = int_to_ptr.vmem [resolvable:$true] %s48
      %s50 = sshll.u32 %s1, 4
      %s51 = int_to_ptr.hbm [resolvable:$true] %s50
      %53 = dma.vmem_to_hbm [thread:$0]  %s49, 256, %s51, [#allocation4]
    $region13: #{tpu_custom_call.1} parent=1 // pred_fallthru
      _
    // Predicated region
    $region14: #{tpu_custom_call.1} parent=1 // pred_check
      _
    $region15: #{tpu_custom_call.1} parent=1 // pred_check_branch
      %55 = sbr.rel (0) target = $region17
    $region16: #{tpu_custom_call.1} parent=1 // pred_region
      %57 = dma.done [#allocation4], 256
    $region17: #{tpu_custom_call.1} parent=1 // pred_fallthru
      _
    %58 = vsyncpa [#allocation3], 1
    %59 = vsyncpa [#allocation4], 1

</llo_original>
